<compile_context>
chip_gen: v7x
topology: tpu7x:2x2x1
jax: 0.10.0
libtpu: 0.0.40
codegen_flags: <defaults>
</compile_context>

<pallas_src>
import jax
import jax.numpy as jnp
from jax.experimental import pallas as pl
from jax.experimental.pallas import tpu as pltpu


def _msc_kernel(x_ref, w_ref, shift_ref, o_ref):
    """One batch element: fused multi-scale conv + folded BN + ReLU.

    x_ref:     [C_in, L]          un-padded input (halo built in VMEM)
    w_ref:     [C_out, K*C_in]    combined multi-scale weights, BN scale folded in
    shift_ref: [C_out, 1]         folded conv bias + BN shift (f32)
    o_ref:     [C_out, L]
    """
    c_in, l_out = x_ref.shape
    kmax = w_ref.shape[1] // c_in
    pad = (kmax - 1) // 2

    # Callers should pass x already in the MXU dtype (bf16 on v5e/v6e/v7x); if not,
    # this cast happens in VMEM only (no extra HBM pass).
    x = x_ref[...]
    if x.dtype != w_ref.dtype:
        x = x.astype(w_ref.dtype)

    # Zero halo for the "same" convolution, built once in VMEM.
    if pad > 0:
        halo = jnp.zeros((c_in, pad), dtype=x.dtype)
        xw = jnp.concatenate([halo, x, halo], axis=1)      # [C_in, L + kmax - 1]
    else:
        xw = x

    # im2col stack: row (k*C_in + c) holds x[c, t + k - pad].  Built once, then a
    # single MXU contraction over K*C_in (accumulation stays in the MXU, f32).
    stack = jnp.concatenate([xw[:, k:k + l_out] for k in range(kmax)], axis=0)

    acc = jnp.dot(w_ref[...], stack, preferred_element_type=jnp.float32)  # [C_out, L]
    y = acc + shift_ref[...]                                              # f32 epilogue
    o_ref[...] = jnp.maximum(y, 0.0).astype(o_ref.dtype)


def prepare_msc_params(conv_weights, conv_biases, bn_gamma, bn_beta,
                       bn_mean, bn_var, *, eps=1e-5, mxu_dtype=None):
    """One-time parameter prep (NOT on the per-call hot path).

    * Zero-pads each conv's taps to the largest kernel size, concatenates along the
      output-channel axis, folds the eval-mode BatchNorm scale into the weights (in
      f32), flattens to [C_out, K*C_in] matching the kernel's im2col row order, and
      optionally casts once to the MXU dtype (bf16 recommended on all generations).
    * Folds conv bias + BN mean/beta into a per-channel shift.
    """
    kmax = max(int(w.shape[-1]) for w in conv_weights)
    parts = []
    for w in conv_weights:                          # w: [c_i, C_in, K_i] (PyTorch OIH)
        k = int(w.shape[-1])
        off = (kmax - k) // 2
        parts.append(jnp.pad(w, ((0, 0), (0, 0), (off, kmax - k - off))))
    w_full = jnp.concatenate(parts, axis=0).astype(jnp.float32)   # [C_out, C_in, kmax]

    scale = (bn_gamma / jnp.sqrt(bn_var + eps)).astype(jnp.float32)       # [C_out]
    w_scaled = w_full * scale[:, None, None]                               # fold in f32
    c_out, c_in, _ = w_scaled.shape
    # Row order of the kernel's im2col stack is (k, c_in) -> flatten as [C_out, K*C_in].
    w_flat = jnp.transpose(w_scaled, (0, 2, 1)).reshape(c_out, kmax * c_in)
    if mxu_dtype is not None:
        w_flat = w_flat.astype(mxu_dtype)           # single cast, after the f32 fold

    bias = jnp.concatenate(list(conv_biases)).astype(jnp.float32)
    shift = ((bias - bn_mean) * scale + bn_beta).astype(jnp.float32)
    return w_flat, shift.reshape(c_out, 1)


def msc_block_forward(x, w_flat, shift, *, out_dtype=None):
    """x: [B, C_in, L] -> [B, C_out, L]  (MSCBlock.forward, eval-mode BN)."""
    B, C_in, L = x.shape
    C_out, KC = w_flat.shape
    out_dtype = out_dtype if out_dtype is not None else x.dtype

    return pl.pallas_call(
        _msc_kernel,
        out_shape=jax.ShapeDtypeStruct((B, C_out, L), out_dtype),
        grid_spec=pltpu.PrefetchScalarGridSpec(
            num_scalar_prefetch=0,
            grid=(B,),
            in_specs=[
                pl.BlockSpec((None, C_in, L), lambda b: (b, 0, 0)),   # x (per batch, no pad)
                pl.BlockSpec((C_out, KC), lambda b: (0, 0)),          # weights (fetched once)
                pl.BlockSpec((C_out, 1), lambda b: (0, 0)),           # shift (fetched once)
            ],
            out_specs=pl.BlockSpec((None, C_out, L), lambda b: (b, 0, 0)),
        ),
        compiler_params=pltpu.CompilerParams(
            dimension_semantics=("parallel",),
            vmem_limit_bytes=40 * 1024 * 1024,
        ),
    )(x, w_flat, shift)


def _reference(x, conv_weights, conv_biases, gamma, beta, mean, var, eps=1e-5):
    """Plain-JAX reference matching MSCBlock.forward (eval-mode BN)."""
    outs = []
    for w, b in zip(conv_weights, conv_biases):
        p = int(w.shape[-1]) // 2
        y = jax.lax.conv_general_dilated(
            x, w, window_strides=(1,), padding=[(p, p)],
            dimension_numbers=("NCH", "OIH", "NCH"),
            precision=jax.lax.Precision.HIGHEST)
        outs.append(y + b[None, :, None])
    y = jnp.concatenate(outs, axis=1)
    y = (y - mean[None, :, None]) / jnp.sqrt(var[None, :, None] + eps)
    y = y * gamma[None, :, None] + beta[None, :, None]
    return jnp.maximum(y, 0.0)


if __name__ == "__main__":
    key = jax.random.PRNGKey(0)
    B, C_in, C_out, L = 2, 8, 16, 100        # small shapes; L deliberately not /128
    ks = (3, 5, 7)
    base = C_out // len(ks)
    chs = [base] * len(ks)
    chs[-1] = C_out - sum(chs[:-1])          # [5, 5, 6] like the PyTorch module

    keys = jax.random.split(key, 2 * len(ks) + 5)
    x = jax.random.normal(keys[0], (B, C_in, L), dtype=jnp.float32)

    conv_ws, conv_bs = [], []
    for i, (k_sz, c) in enumerate(zip(ks, chs)):
        bound = 1.0 / jnp.sqrt(jnp.float32(C_in * k_sz))     # nn.Conv1d default init
        conv_ws.append(jax.random.uniform(keys[1 + 2 * i], (c, C_in, k_sz),
                                          jnp.float32, -bound, bound))
        conv_bs.append(jax.random.uniform(keys[2 + 2 * i], (c,),
                                          jnp.float32, -bound, bound))

    # Non-trivial BN stats/affine to exercise the fold (eval-mode semantics).
    gamma = jax.random.uniform(keys[-4], (C_out,), jnp.float32, 0.5, 1.5)
    beta = jax.random.uniform(keys[-3], (C_out,), jnp.float32, -0.5, 0.5)
    mean = jax.random.uniform(keys[-2], (C_out,), jnp.float32, -0.5, 0.5)
    var = jax.random.uniform(keys[-1], (C_out,), jnp.float32, 0.5, 1.5)

    y_ref = _reference(x, conv_ws, conv_bs, gamma, beta, mean, var)

    # f32 MXU path (tight numerical check).
    w_f32, shift = prepare_msc_params(conv_ws, conv_bs, gamma, beta, mean, var)
    y = jax.block_until_ready(msc_block_forward(x, w_f32, shift))
    assert y.shape == (B, C_out, L)
    assert jnp.allclose(y, y_ref, atol=2e-3, rtol=2e-3), "f32 kernel mismatch"

    # bf16 MXU path (recommended on all generations): bf16 weights AND bf16
    # activations end-to-end; accumulation and the BN/ReLU epilogue stay f32.
    w_bf16, shift_b = prepare_msc_params(conv_ws, conv_bs, gamma, beta, mean, var,
                                         mxu_dtype=jnp.bfloat16)
    x_bf16 = x.astype(jnp.bfloat16)          # demo cast; real callers keep x bf16 upstream
    y_bf16 = jax.block_until_ready(msc_block_forward(x_bf16, w_bf16, shift_b))
    assert y_bf16.shape == (B, C_out, L)
    assert jnp.allclose(y_bf16.astype(jnp.float32), y_ref, atol=5e-2, rtol=5e-2), \
        "bf16 kernel mismatch"

    print("KERNEL_OK")
</pallas_src>

<mosaic_0001>
module attributes {stable_mosaic.version = 11 : i64} {
  func.func @_msc_kernel(%arg0: i32, %arg1: memref<1x8x100xf32, #tpu.memory_space<vmem>>, %arg2: memref<16x56xf32, #tpu.memory_space<vmem>>, %arg3: memref<16x1xf32, #tpu.memory_space<vmem>>, %arg4: memref<1x16x100xf32, #tpu.memory_space<vmem>>) attributes {dimension_semantics = [#tpu.dimension_semantics<parallel>], iteration_bounds = array<i64: 2>, scalar_prefetch = 0 : i64, scratch_operands = 0 : i64, tpu.core_type = #tpu.core_type<tc>, window_params = [{transform_indices = @transform_0, window_bounds = array<i64: 1, 8, 100>}, {pipeline_mode = #tpu.pipeline_mode<synchronous>, transform_indices = @transform_1, window_bounds = array<i64: 16, 56>}, {pipeline_mode = #tpu.pipeline_mode<synchronous>, transform_indices = @transform_2, window_bounds = array<i64: 16, 1>}, {transform_indices = @transform_3, window_bounds = array<i64: 1, 16, 100>}]} {
    %c0 = arith.constant 0 : index
    %c0_0 = arith.constant 0 : index
    %c0_1 = arith.constant 0 : index
    %0 = vector.load %arg1[%c0, %c0_0, %c0_1] : memref<1x8x100xf32, #tpu.memory_space<vmem>>, vector<1x8x100xf32>
    %1 = vector.shape_cast %0 : vector<1x8x100xf32> to vector<8x100xf32>
    %cst = arith.constant 0.000000e+00 : f32
    %2 = vector.broadcast %cst : f32 to vector<8x3xf32>
    %3 = tpu.concatenate %2, %1, %2 in 1 : vector<8x3xf32>, vector<8x100xf32>, vector<8x3xf32> -> vector<8x106xf32>
    %4 = vector.extract_strided_slice %3 {offsets = [0, 0], sizes = [8, 100], strides = [1, 1]} : vector<8x106xf32> to vector<8x100xf32>
    %5 = vector.extract_strided_slice %3 {offsets = [0, 1], sizes = [8, 100], strides = [1, 1]} : vector<8x106xf32> to vector<8x100xf32>
    %6 = vector.extract_strided_slice %3 {offsets = [0, 2], sizes = [8, 100], strides = [1, 1]} : vector<8x106xf32> to vector<8x100xf32>
    %7 = vector.extract_strided_slice %3 {offsets = [0, 3], sizes = [8, 100], strides = [1, 1]} : vector<8x106xf32> to vector<8x100xf32>
    %8 = vector.extract_strided_slice %3 {offsets = [0, 4], sizes = [8, 100], strides = [1, 1]} : vector<8x106xf32> to vector<8x100xf32>
    %9 = vector.extract_strided_slice %3 {offsets = [0, 5], sizes = [8, 100], strides = [1, 1]} : vector<8x106xf32> to vector<8x100xf32>
    %10 = vector.extract_strided_slice %3 {offsets = [0, 6], sizes = [8, 100], strides = [1, 1]} : vector<8x106xf32> to vector<8x100xf32>
    %11 = tpu.concatenate %4, %5, %6, %7, %8, %9, %10 in 0 : vector<8x100xf32>, vector<8x100xf32>, vector<8x100xf32>, vector<8x100xf32>, vector<8x100xf32>, vector<8x100xf32>, vector<8x100xf32> -> vector<56x100xf32>
    %c0_2 = arith.constant 0 : index
    %c0_3 = arith.constant 0 : index
    %12 = vector.load %arg2[%c0_2, %c0_3] : memref<16x56xf32, #tpu.memory_space<vmem>>, vector<16x56xf32>
    %cst_4 = arith.constant dense<0.000000e+00> : vector<16x100xf32>
    %13 = tpu.matmul %12, %11, %cst_4 {dimension_numbers = #tpu.dot_dimension_numbers<[1], [0], [0], [1], [0, 0, 1, 1], [], []>} : vector<16x56xf32>, vector<56x100xf32>, vector<16x100xf32> -> vector<16x100xf32>
    %c0_5 = arith.constant 0 : index
    %c0_6 = arith.constant 0 : index
    %14 = vector.load %arg3[%c0_5, %c0_6] : memref<16x1xf32, #tpu.memory_space<vmem>>, vector<16x1xf32>
    %15 = vector.broadcast %14 : vector<16x1xf32> to vector<16x100xf32>
    %16 = arith.addf %13, %15 : vector<16x100xf32>
    %cst_7 = arith.constant 0.000000e+00 : f32
    %17 = vector.broadcast %cst_7 : f32 to vector<16x100xf32>
    %18 = arith.maximumf %16, %17 : vector<16x100xf32>
    %c0_8 = arith.constant 0 : index
    %c0_9 = arith.constant 0 : index
    %c0_10 = arith.constant 0 : index
    %19 = vector.load %arg4[%c0_8, %c0_9, %c0_10] : memref<1x16x100xf32, #tpu.memory_space<vmem>>, vector<1x16x100xf32>
    %20 = vector.shape_cast %19 : vector<1x16x100xf32> to vector<16x100xf32>
    %21 = vector.shape_cast %18 : vector<16x100xf32> to vector<1x16x100xf32>
    tpu.vector_store %arg4[%c0_8, %c0_9, %c0_10], %21 {strides = array<i32>} : memref<1x16x100xf32, #tpu.memory_space<vmem>>, vector<1x16x100xf32>,
    return
  }
  func.func @transform_0(%arg0: i32) -> (i32, i32, i32) {
    %c0_i32 = arith.constant 0 : i32
    %c0_i32_0 = arith.constant 0 : i32
    %c0_i32_1 = arith.constant 0 : i32
    return %arg0, %c0_i32, %c0_i32_0 : i32, i32, i32
  }
  func.func @transform_1(%arg0: i32) -> (i32, i32) {
    %c0_i32 = arith.constant 0 : i32
    %c0_i32_0 = arith.constant 0 : i32
    %c0_i32_1 = arith.constant 0 : i32
    return %c0_i32, %c0_i32_0 : i32, i32
  }
  func.func @transform_2(%arg0: i32) -> (i32, i32) {
    %c0_i32 = arith.constant 0 : i32
    %c0_i32_0 = arith.constant 0 : i32
    %c0_i32_1 = arith.constant 0 : i32
    return %c0_i32, %c0_i32_0 : i32, i32
  }
  func.func @transform_3(%arg0: i32) -> (i32, i32, i32) {
    %c0_i32 = arith.constant 0 : i32
    %c0_i32_0 = arith.constant 0 : i32
    %c0_i32_1 = arith.constant 0 : i32
    return %arg0, %c0_i32, %c0_i32_0 : i32, i32, i32
  }
}

</mosaic_0001>

<llo_original>
// kernel: tpu_custom_call.1
$region0: #{tpu_custom_call.1}
  #allocation0 [shape = 'u32[]', space=smem, size = 0x4, offset = 0x4, fixed_abs, tag = 'smem constant byte address 0x4 - core index']
  #allocation1 [shape = 'u32[144,128]{1,0:T(1,128)}', space=vmem, size = 0x12000, scoped, tag = 'internal scratch']
  %s0 = inlined_call_operand.vmem [shape: f32[2,8,100], index: 0, kind: input, shape index: {}]
  %s1 = inlined_call_operand.hbm [shape: f32[16,56], index: 1, kind: input, shape index: {}]
  %s2 = inlined_call_operand.vmem [shape: f32[16,1], index: 2, kind: input, shape index: {}]
  %s3 = inlined_call_operand.hbm [shape: f32[2,16,100], index: 3, kind: output, shape index: {}]
  %s4 = sld [smem:[#allocation0]]
  $region49: #{tpu_custom_call.1} parent=0
    _
  %s6 = ssub.s32 1, %s4
  %s7 = scalar_select 0, %s6, %s4
  $region1: #{tpu_custom_call.1} parent=0
    #allocation2 [shape = 'u8[8192]{0}', space=vmem, size = 0x2000, scoped, tag = 'input window, operand 1, single buffered']
    #allocation3 [shape = 's32[2]{0}', space=sflag, size = 0x8, scoped, tag = 'scoped memory for tpu_custom_call.1']
    #allocation4 [shape = 's32[2]{0}', space=sflag, size = 0x8, scoped, tag = 'scoped memory for tpu_custom_call.1']
    #allocation5 [shape = 'u8[16384]{0}', space=vmem, size = 0x4000, scoped, tag = 'output window, operand 0']
    %8 = vsyncpa [#allocation3], 0
    %9 = vsyncpa [#allocation4], 0
    %s10 = scalar_lea.sflag [#allocation4], 1
    %11 = vsyncpa %s10, 0
    loop: start=0, step=1, limit=4
    $region2: #{tpu_custom_call.1} parent=1 // loop_pre_header
      _
    $region3: #{tpu_custom_call.1} parent=1 // loop_header
      %s13 = sphi 0, %s17
      %p14 = scmp.ge.s32.totalorder %s13, 4
      %s23 = sphi 0, %s25
      %s26 = sphi 0, %s23
      %s27 = sphi 0, %s26
      %s43 = sphi 0, %s27
      %s47 = sphi 0, %s47
      %s49 = sphi 0, %s47
      %s50 = sphi 0, %s49
      %s64 = sphi 0, %s50
      %s68 = sphi 0, %s68
      %s70 = sphi 0, %s68
      %s71 = sphi 0, %s70
      %s85 = sphi 0, %s71
      %s91 = sphi 0, %s93
      %s94 = sphi 0, %s91
      %s95 = sphi 0, %s94
      %s111 = sphi 0, %s95
    $region4: #{tpu_custom_call.1} parent=1 // loop_header_branch
      %16 = sbr.rel (%p14) target = $region8
    $region5: #{tpu_custom_call.1} parent=1 // loop_body
      %s18 = ssub.s32 %s13, 1
      %s19 = ssub.s32 %s13, 2
      %s20 = sadd.s32 %s13, 1
      %s21 = ssub.s32 %s13, %s20
      %p22 = scmp.eq.s32.totalorder %s21, 0
      %s24 = sadd.s32 %s23, 1
      %s25 = scalar_select %p22, %s23, %s24
      %p28 = pneg %p22
      %p29 = scmp.eq.s32.totalorder %s13, 1
      %p30 = por %p28, %p29
      %p31 = scmp.ne.s32.totalorder %s23, %s26
      %p32 = scmp.eq.s32.totalorder %s13, 0
      %p33 = por %p31, %p32
      %p34 = scmp.ne.s32.totalorder %s23, %s26
      %p35 = scmp.eq.s32.totalorder %s18, 1
      %p36 = por %p34, %p35
      %p37 = scmp.ne.s32.totalorder %s26, %s27
      %p38 = scmp.eq.s32.totalorder %s18, 0
      %p39 = por %p37, %p38
      %p40 = scmp.ne.s32.totalorder %s26, %s27
      %p41 = scmp.eq.s32.totalorder %s19, 1
      %p42 = por %p40, %p41
      %p44 = scmp.ne.s32.totalorder %s27, %s43
      %p45 = scmp.eq.s32.totalorder %s19, 0
      %p46 = por %p44, %p45
      %s48 = sadd.s32 %s47, 1
      %p51 = scmp.eq.s32.totalorder %s13, 1
      %p52 = scmp.ne.s32.totalorder %s47, %s49
      %p53 = scmp.eq.s32.totalorder %s13, 0
      %p54 = por %p52, %p53
      %p55 = scmp.ne.s32.totalorder %s47, %s49
      %p56 = scmp.eq.s32.totalorder %s18, 1
      %p57 = por %p55, %p56
      %p58 = scmp.ne.s32.totalorder %s49, %s50
      %p59 = scmp.eq.s32.totalorder %s18, 0
      %p60 = por %p58, %p59
      %p61 = scmp.ne.s32.totalorder %s49, %s50
      %p62 = scmp.eq.s32.totalorder %s19, 1
      %p63 = por %p61, %p62
      %p65 = scmp.ne.s32.totalorder %s50, %s64
      %p66 = scmp.eq.s32.totalorder %s19, 0
      %p67 = por %p65, %p66
      %s69 = sadd.s32 %s68, 1
      %p72 = scmp.eq.s32.totalorder %s13, 1
      %p73 = scmp.ne.s32.totalorder %s68, %s70
      %p74 = scmp.eq.s32.totalorder %s13, 0
      %p75 = por %p73, %p74
      %p76 = scmp.ne.s32.totalorder %s68, %s70
      %p77 = scmp.eq.s32.totalorder %s18, 1
      %p78 = por %p76, %p77
      %p79 = scmp.ne.s32.totalorder %s70, %s71
      %p80 = scmp.eq.s32.totalorder %s18, 0
      %p81 = por %p79, %p80
      %p82 = scmp.ne.s32.totalorder %s70, %s71
      %p83 = scmp.eq.s32.totalorder %s19, 1
      %p84 = por %p82, %p83
      %p86 = scmp.ne.s32.totalorder %s71, %s85
      %p87 = scmp.eq.s32.totalorder %s19, 0
      %p88 = por %p86, %p87
      %s89 = ssub.s32 %s13, %s20
      %p90 = scmp.eq.s32.totalorder %s89, 0
      %s92 = sadd.s32 %s91, 1
      %s93 = scalar_select %p90, %s91, %s92
      %p96 = pneg %p90
      %p97 = scmp.eq.s32.totalorder %s13, 1
      %p98 = por %p96, %p97
      %p99 = scmp.ne.s32.totalorder %s91, %s94
      %p100 = scmp.eq.s32.totalorder %s13, 0
      %p101 = por %p99, %p100
      %p102 = scmp.ne.s32.totalorder %s91, %s94
      %p103 = scmp.eq.s32.totalorder %s18, 1
      %p104 = por %p102, %p103
      %p105 = scmp.ne.s32.totalorder %s94, %s95
      %p106 = scmp.eq.s32.totalorder %s18, 0
      %p107 = por %p105, %p106
      %p108 = scmp.ne.s32.totalorder %s94, %s95
      %p109 = scmp.eq.s32.totalorder %s19, 1
      %p110 = por %p108, %p109
      %p112 = scmp.ne.s32.totalorder %s95, %s111
      %p113 = scmp.eq.s32.totalorder %s19, 0
      %p114 = por %p112, %p113
      %p115 = scmp.le.s32.totalorder 1, %s13
      %p116 = scmp.lt.s32.totalorder %s13, 3
      %p117 = pnand %p115, %p116
      %p118 = pneg %p117
      // Predicated region
      $region9: #{tpu_custom_call.1} parent=5 // pred_check
        _
      $region10: #{tpu_custom_call.1} parent=5 // pred_check_branch
        %120 = sbr.rel (%p117) target = $region12
      $region11: #{tpu_custom_call.1} parent=5 // pred_region
        %s121 = ssub.s32 %s13, 1
        // Predicated region
        $region13: #{tpu_custom_call.1} parent=11 // pred_check
          %p122 = pneg %p60
        $region14: #{tpu_custom_call.1} parent=11 // pred_check_branch
          %124 = sbr.rel (%p122) target = $region16
        $region15: #{tpu_custom_call.1} parent=11 // pred_region
          %s126 = ssub.s32 256, 256
          %127 = vsyncadd [#allocation3], %s126
          %s128 = sshll.u32 [#allocation2], 4
          %s129 = int_to_ptr.vmem [resolvable:$true] %s128
          %134 = dma.hbm_to_vmem [thread:$0]  %s1, 256, %s129, [#allocation3], 128, 128, 8
        $region16: #{tpu_custom_call.1} parent=11 // pred_fallthru
          _
        // Predicated region
        $region17: #{tpu_custom_call.1} parent=11 // pred_check
          %p135 = pneg %p81
        $region18: #{tpu_custom_call.1} parent=11 // pred_check_branch
          %137 = sbr.rel (%p135) target = $region20
        $region19: #{tpu_custom_call.1} parent=11 // pred_region
          _
        $region20: #{tpu_custom_call.1} parent=11 // pred_fallthru
          _
      $region12: #{tpu_custom_call.1} parent=5 // pred_fallthru
        _
      %p138 = scmp.lt.s32.totalorder %s13, 2
      // Predicated region
      $region21: #{tpu_custom_call.1} parent=5 // pred_check
        %p139 = pneg %p138
      $region22: #{tpu_custom_call.1} parent=5 // pred_check_branch
        %141 = sbr.rel (%p139) target = $region24
      $region23: #{tpu_custom_call.1} parent=5 // pred_region
        // Predicated region
        $region25: #{tpu_custom_call.1} parent=23 // pred_check
          %p142 = pneg %p33
        $region26: #{tpu_custom_call.1} parent=23 // pred_check_branch
          %144 = sbr.rel (%p142) target = $region28
        $region27: #{tpu_custom_call.1} parent=23 // pred_region
          %p145 = scmp.lt.s32.totalorder %s13, 1
          %s146 = scalar_select %p145, %s13, 1
          %s147 = smul.addr %s146, 8
          %s148 = scalar_lea.vmem %s0, %s147
        $region28: #{tpu_custom_call.1} parent=23 // pred_fallthru
          _
      $region24: #{tpu_custom_call.1} parent=5 // pred_fallthru
        _
      %p149 = scmp.le.s32.totalorder 1, %s13
      %p150 = scmp.lt.s32.totalorder %s13, 3
      %p151 = pnand %p149, %p150
      %p152 = pneg %p151
      // Predicated region
      $region29: #{tpu_custom_call.1} parent=5 // pred_check
        _
      $region30: #{tpu_custom_call.1} parent=5 // pred_check_branch
        %154 = sbr.rel (%p151) target = $region32
      $region31: #{tpu_custom_call.1} parent=5 // pred_region
        %s155 = ssub.s32 %s13, 1
        // Predicated region
        $region33: #{tpu_custom_call.1} parent=31 // pred_check
          %p156 = pneg %p60
        $region34: #{tpu_custom_call.1} parent=31 // pred_check_branch
          %158 = sbr.rel (%p156) target = $region36
        $region35: #{tpu_custom_call.1} parent=31 // pred_region
          %159 = dma.done [#allocation3], 256
        $region36: #{tpu_custom_call.1} parent=31 // pred_fallthru
          _
        %p160 = scmp.lt.s32.totalorder %s18, 1
        %s161 = scalar_select %p160, %s18, 1
        %s162 = smul.addr %s161, 8
        %s163 = scalar_lea.vmem %s0, %s162
        %p164 = pneg %p39
        %p165 = pneg %p36
        %p166 = pneg %p60
        %p167 = pneg %p57
        %p168 = pneg %p81
        %p169 = pneg %p78
        %p170 = pneg %p107
        %p171 = pneg %p104
        %s172 = sand.u32 %s94, 1
        %s173 = scalar_lea.sflag [#allocation4], %s172
        %s174 = sand.u32 %s94, 1
        %s175 = smul.addr %s174, 16
        %s176 = scalar_lea.vmem [#allocation5], %s175
        %p177 = scmp.lt.s32.totalorder %s18, 1
        %s178 = scalar_select %p177, %s18, 1
        %s179 = smul.addr %s178, 8
        %s180 = scalar_lea.vmem %s0, %s179
        %v181 = vld [vmem:[%s180] sm:$0xff]
        %183 = vrot.lane.b32.xlu0 %v181, 3
        %v184 = vpop.permute.xlu0 %183
        %vm186 = vcmask 23552
        %v187 = vsel %vm186, 0.0, %v184
        %vm188 = vcmask 842752
        %v189 = vsel %vm188, %v187, 0.0
        %191 = vrot.lane.b32.xlu0 %v189, 127
        %v192 = vpop.permute.xlu0 %191
        %194 = vrot.lane.b32.xlu0 %v189, 126
        %v195 = vpop.permute.xlu0 %194
        %197 = vrot.lane.b32.xlu0 %v189, 125
        %v198 = vpop.permute.xlu0 %197
        %200 = vrot.lane.b32.xlu0 %v189, 124
        %v201 = vpop.permute.xlu0 %200
        %203 = vrot.lane.b32.xlu0 %v189, 123
        %v204 = vpop.permute.xlu0 %203
        %206 = vrot.lane.b32.xlu0 %v189, 122
        %v207 = vpop.permute.xlu0 %206
        %v209 = vld [vmem:[#allocation2] sm:$0xff]
        %v210 = vld [vmem:[#allocation2 + $0x8] sm:$0xff]
        %v211 = vld [vmem:[%s2] sm:$0xff]
        %v212 = vld [vmem:[%s2 + $0x8] sm:$0xff]
        %214 = vset.pattern.permute.xlu0 0
        %215 = vperm.xlu0 %214, %v211
        %v216 = vpop.permute.xlu0 %215
        %219 = vset.pattern.permute.xlu0 0
        %220 = vperm.xlu0 %219, %v212
        %v221 = vpop.permute.xlu0 %220
        %vm223 = vcmask 457728
        %v225 = vsel %vm223, %v209, 0
        %v228 = vsel %vm223, %v210, 0
        %230 = vmatprep.subr.mxu0 0.0
        %231 = vmatpush1.msra.mxu0 %v189
        %232 = vmatprep.subr.mxu0 0.0
        %233 = vmatpush1.msra.mxu0 %v192
        %234 = vmatprep.subr.mxu0 0.0
        %235 = vmatpush1.msra.mxu0 %v195
        %236 = vmatprep.subr.mxu0 0.0
        %237 = vmatpush1.msra.mxu0 %v198
        %238 = vmatprep.subr.mxu0 0.0
        %239 = vmatpush1.msra.mxu0 %v201
        %240 = vmatprep.subr.mxu0 0.0
        %241 = vmatpush1.msra.mxu0 %v204
        %242 = vmatprep.subr.mxu0 0.0
        %243 = vmatpush1.msra.mxu0 %v207
        %244 = vmatprep.subr.mxu0 0.0
        %245 = vmatpush1.msra.mxu0 0.0
        %246 = vmatprep.subr.mxu0 0.0
        %247 = vmatpush1.msra.mxu0 0.0
        %248 = vmatprep.subr.mxu0 0.0
        %249 = vmatpush1.msra.mxu0 0.0
        %250 = vmatprep.subr.mxu0 0.0
        %251 = vmatpush1.msra.mxu0 0.0
        %252 = vmatprep.subr.mxu0 0.0
        %253 = vmatpush1.msra.mxu0 0.0
        %254 = vmatprep.subr.mxu0 0.0
        %255 = vmatpush1.msra.mxu0 0.0
        %256 = vmatprep.subr.mxu0 0.0
        %257 = vmatpush1.msra.mxu0 0.0
        %258 = vmatprep.subr.mxu0 0.0
        %259 = vmatpush1.msra.mxu0 0.0
        %260 = vmatprep.subr.mxu0 0.0
        %261 = vmatpush1.msra.mxu0 0.0
        %262 = vmatprep.subr.mxu0 0.0
        %263 = vmatpush1.msra.mxu0 0.0
        %264 = vmatprep.subr.mxu0 0.0
        %265 = vmatpush1.msra.mxu0 0.0
        %266 = vmatprep.subr.mxu0 0.0
        %267 = vmatpush1.msra.mxu0 0.0
        %268 = vmatprep.subr.mxu0 0.0
        %269 = vmatpush1.msra.mxu0 0.0
        %270 = vmatprep.subr.mxu0 0.0
        %271 = vmatpush1.msra.mxu0 0.0
        %272 = vmatprep.subr.mxu0 0.0
        %273 = vmatpush1.msra.mxu0 0.0
        %274 = vmatprep.subr.mxu0 0.0
        %275 = vmatpush1.msra.mxu0 0.0
        %276 = vmatprep.subr.mxu0 0.0
        %277 = vmatpush1.msra.mxu0 0.0
        %278 = vmatprep.subr.mxu0 0.0
        %279 = vmatpush1.msra.mxu0 0.0
        %280 = vmatprep.subr.mxu0 0.0
        %281 = vmatpush1.msra.mxu0 0.0
        %282 = vmatprep.subr.mxu0 0.0
        %283 = vmatpush1.msra.mxu0 0.0
        %284 = vmatprep.subr.mxu0 0.0
        %285 = vmatpush1.msra.mxu0 0.0
        %286 = vmatprep.subr.mxu0 0.0
        %287 = vmatpush1.msra.mxu0 0.0
        %288 = vmatprep.subr.mxu0 0.0
        %289 = vmatpush1.msra.mxu0 0.0
        %290 = vmatprep.subr.mxu0 0.0
        %291 = vmatpush1.msra.mxu0 0.0
        %292 = vmatprep.subr.mxu0 0.0
        %293 = vmatpush1.msra.mxu0 0.0
        %294 = vmatprep.mubr.f32.mxu0 0.0
        %295 = vmatmul.mubr.f32.gmra.mrb[0].mxu0 %v225
        %v296 = vpop.f32.mrb[0].mxu0
        %v297 = vadd.f32 %v216, %v296
        %v298 = vpop.f32.mrb[0].mxu0
        %299 = vmatprep.mubr.f32.mxu0 0.0
        %300 = vmatmul.mubr.f32.gmra.mrb[0].mxu0 %v228
        %v301 = vpop.f32.mrb[0].mxu0
        %v302 = vadd.f32 %v221, %v301
        %v303 = vpop.f32.mrb[0].mxu0
        %304 = vdwg.mxu0
        %v305 = vmax.f32 %v297, 0.0
        %v306 = vmax.f32 %v302, 0.0
        %vm307 = vcmask 818176
        %308 = vst.msk [vmem:[%s176] sm:$0xff] %vm307, %v305
        %309 = vst.msk [vmem:[%s176 + $0x8] sm:$0xff] %vm307, %v306
        %s310 = sand.u32 %s94, 1
        %s311 = scalar_lea.sflag [#allocation4], %s310
        %s312 = sand.u32 %s94, 1
        %s313 = smul.addr %s312, 16
        %s314 = scalar_lea.vmem [#allocation5], %s313
        // Predicated region
        $region37: #{tpu_custom_call.1} parent=31 // pred_check
          %p315 = pneg %p104
        $region38: #{tpu_custom_call.1} parent=31 // pred_check_branch
          %317 = sbr.rel (%p315) target = $region40
        $region39: #{tpu_custom_call.1} parent=31 // pred_region
          %s319 = ssub.s32 256, 256
          %320 = vsyncadd %s311, %s319
          %s321 = smul.addr %s18, 2
          %s322 = smul.addr %s321, 128
          %s323 = scalar_lea.hbm %s3, %s322
          %s324 = sshll.u32 %s314, 4
          %s325 = int_to_ptr.vmem [resolvable:$true] %s324
          %330 = dma.vmem_to_hbm [thread:$0]  %s325, 256, %s323, %s311, 128, 128, 8
        $region40: #{tpu_custom_call.1} parent=31 // pred_fallthru
          _
      $region32: #{tpu_custom_call.1} parent=5 // pred_fallthru
        _
      %p331 = scmp.le.s32.totalorder 2, %s13
      // Predicated region
      $region41: #{tpu_custom_call.1} parent=5 // pred_check
        %p332 = pneg %p331
      $region42: #{tpu_custom_call.1} parent=5 // pred_check_branch
        %334 = sbr.rel (%p332) target = $region44
      $region43: #{tpu_custom_call.1} parent=5 // pred_region
        %s335 = ssub.s32 %s13, 2
        // Predicated region
        $region45: #{tpu_custom_call.1} parent=43 // pred_check
          %p336 = pneg %p110
        $region46: #{tpu_custom_call.1} parent=43 // pred_check_branch
          %338 = sbr.rel (%p336) target = $region48
        $region47: #{tpu_custom_call.1} parent=43 // pred_region
          %s339 = sand.u32 %s95, 1
          %s340 = scalar_lea.sflag [#allocation4], %s339
          %s341 = sand.u32 %s95, 1
          %s342 = smul.addr %s341, 16
          %s343 = scalar_lea.vmem [#allocation5], %s342
          %344 = dma.done %s340, 256
        $region48: #{tpu_custom_call.1} parent=43 // pred_fallthru
          _
      $region44: #{tpu_custom_call.1} parent=5 // pred_fallthru
        _
    $region6: #{tpu_custom_call.1} parent=1 // loop_footer
      %s17 = sadd.s32 1, %s13
    $region7: #{tpu_custom_call.1} parent=1 // loop_footer_branch
      %12 = sbr.rel target = $region3
    $region8: #{tpu_custom_call.1} parent=1 // loop_exit
      _
    %345 = vsyncpa [#allocation3], 1
    %s346 = scalar_lea.sflag [#allocation3], 1
    %347 = vsyncpa %s346, 1
    %348 = vsyncpa [#allocation4], 1
    %s349 = scalar_lea.sflag [#allocation4], 1
    %350 = vsyncpa %s349, 1

</llo_original>
